<compile_context>
chip_gen: v5e
topology: v5e:2x2
jax: 0.10.0
libtpu: 0.0.40
codegen_flags: <defaults>
</compile_context>

<pallas_src>
import jax
import jax.numpy as jnp
from jax import lax
from jax.experimental import pallas as pl
from jax.experimental.pallas import tpu as pltpu

K = 7      # conv kernel size
PAD = 3    # padding = 3 -> "same" output


# ---------------------------------------------------------------------------
# Kernel A: streaming channel sum / max, lane-dense (N, C, H*W) layout.
# ---------------------------------------------------------------------------
def channel_reduce_kernel(x_ref, o_ref):
    # x_ref: (nb, Cc, L) VMEM -- one channel chunk of nb batch elements
    # o_ref: (nb, 2,  L) VMEM -- [channel-sum, channel-max]; resident across the
    #                            channel-chunk grid axis (accumulator).
    c_idx = pl.program_id(1)
    _, cc, _ = x_ref.shape

    x0 = x_ref[:, 0].astype(jnp.float32)            # (nb, L)
    ps, pm = x0, x0
    for j in range(1, cc):                          # Cc kept small by the
        xj = x_ref[:, j].astype(jnp.float32)        # wrapper -> bounded unroll
        ps = ps + xj
        pm = jnp.maximum(pm, xj)

    @pl.when(c_idx == 0)
    def _():
        o_ref[:, 0, :] = ps
        o_ref[:, 1, :] = pm

    @pl.when(c_idx > 0)
    def _():
        o_ref[:, 0, :] = o_ref[:, 0, :] + ps
        o_ref[:, 1, :] = jnp.maximum(o_ref[:, 1, :], pm)


# ---------------------------------------------------------------------------
# Kernel B: 7x7 "same" conv as banded matmuls on the MXU, + bias + sigmoid.
# ---------------------------------------------------------------------------
def conv_sigmoid_kernel(cat_ref, ty_ref, tx_ref, b_ref, o_ref):
    # cat_ref: (1, H, 2W)  VMEM -- [channel-sum | channel-max] on the lane axis
    # ty_ref : (K, H, H)   VMEM -- row shift-with-zero-fill operators (per dy)
    # tx_ref : (K, 2W, W)  VMEM -- banded column operators, both input channels
    #                              stacked on the contraction dim; 1/C folded
    #                              into the sum-channel rows.
    # b_ref  : (1,)        SMEM -- conv bias
    # o_ref  : (1, 1, H, W) VMEM
    H, W = o_ref.shape[2], o_ref.shape[3]
    kk = ty_ref.shape[0]
    hp = lax.Precision.HIGHEST

    cat = cat_ref[0].astype(jnp.float32)            # (H, 2W)
    acc = jnp.zeros((H, W), jnp.float32)
    for dy in range(kk):
        # Column (x) contraction for BOTH channels in one (H,2W)@(2W,W) matmul,
        # then the row (y) shift-with-zero-fill via Ty[dy].
        u = jnp.dot(cat, tx_ref[dy],
                    preferred_element_type=jnp.float32, precision=hp)
        acc = acc + jnp.dot(ty_ref[dy], u,
                            preferred_element_type=jnp.float32, precision=hp)
    o_ref[0, 0] = jax.nn.sigmoid(acc + b_ref[0]).astype(o_ref.dtype)


# ---------------------------------------------------------------------------
# Tiling helpers.
# ---------------------------------------------------------------------------
def _largest_divisor_leq(n, cap):
    cap = max(1, min(int(cap), n))
    for d in range(cap, 0, -1):
        if n % d == 0:
            return d
    return 1


def _pick_channel_chunk(C, bytes_per_channel, target_bytes=1 << 20, max_cc=32):
    """Divisor of C that is a multiple of 8 (or all of C), sized so one chunk's
    DMA sits near the ~1 MiB sweet spot and the in-kernel unroll stays bounded."""
    if C <= 8 or (C <= max_cc and C * bytes_per_channel <= target_bytes):
        return C
    best = 0
    cc = 8
    while cc < C and cc <= max_cc:
        if C % cc == 0 and cc * bytes_per_channel <= target_bytes:
            best = cc
        cc += 8
    if best:
        return best
    # TODO(synk): mask ragged channel chunks for C with no 8-aligned divisor.
    return C


def _pick_batch_tile(N, block_bytes_per_batch, target_bytes=2 << 20):
    """Largest divisor of N fitting the target while keeping >= 2 batch grid
    steps (so both v7x TensorCores get work on the parallel axis)."""
    nb = _largest_divisor_leq(N, max(1, target_bytes // max(block_bytes_per_batch, 1)))
    while N >= 2 and N // nb < 2:
        nb = _largest_divisor_leq(N, nb - 1)
    return nb


# ---------------------------------------------------------------------------
# Wrapper.
# ---------------------------------------------------------------------------
def spatial_attention(x, weight, bias, *, batch_block=None, channel_chunk=None):
    """x: (N, C, H, W); weight: (1, 2, 7, 7); bias: (1,). Returns (N, 1, H, W) f32."""
    N, C, H, W = x.shape
    assert weight.shape == (1, 2, K, K), weight.shape
    L = H * W
    itemsize = jnp.dtype(x.dtype).itemsize

    # ---- pass 1: channel sum / max in a lane-dense (N, C, H*W) view ---------
    x2 = x.reshape(N, C, L)                          # free reshape, no data move
    cc = channel_chunk if channel_chunk is not None else _pick_channel_chunk(
        C, L * itemsize)
    nb = batch_block if batch_block is not None else _pick_batch_tile(
        N, cc * L * itemsize)

    x_block_bytes = nb * cc * L * itemsize
    o_block_bytes = nb * 2 * L * 4
    vmem_a = int(min(48 << 20,
                     max(16 << 20,
                         2 * x_block_bytes + 2 * o_block_bytes + (4 << 20))))

    maps_flat = pl.pallas_call(
        channel_reduce_kernel,
        out_shape=jax.ShapeDtypeStruct((N, 2, L), jnp.float32),
        grid=(N // nb, C // cc),                     # reduction axis (C) last
        in_specs=[pl.BlockSpec((nb, cc, L), lambda n, c: (n, c, 0))],
        out_specs=pl.BlockSpec((nb, 2, L), lambda n, c: (n, 0, 0)),
        compiler_params=pltpu.CompilerParams(
            dimension_semantics=("parallel", "arbitrary"),
            vmem_limit_bytes=vmem_a),
    )(x2)

    # [sum | max] concatenated along the lane axis (tiny; done by XLA, so no
    # in-kernel concatenate is needed in the conv kernel).
    cat_maps = (maps_flat.reshape(N, 2, H, W)
                .transpose(0, 2, 1, 3)
                .reshape(N, H, 2 * W))

    # ---- conv operators (built once in the wrapper; tiny) -------------------
    w = weight.astype(jnp.float32)[0]                # (2, K, K)
    w = w * jnp.array([1.0 / C, 1.0], jnp.float32)[:, None, None]  # fold mean scale
    b = bias.astype(jnp.float32).reshape(1)

    #   Ty[dy][y, i] = 1  iff  i == y + dy - PAD      (row shift, zero-fill)
    ty = (jnp.arange(H)[None, :, None] + jnp.arange(K)[:, None, None] - PAD
          == jnp.arange(H)[None, None, :]).astype(jnp.float32)       # (K, H, H)
    #   Txc[c,dy][j, x] = w[c, dy, j - x + PAD]  iff 0 <= j - x + PAD < K
    d = jnp.arange(W)[:, None] - jnp.arange(W)[None, :] + PAD        # (W, W)
    band = (d >= 0) & (d < K)
    txc = jnp.where(band[None, None], w[:, :, jnp.clip(d, 0, K - 1)], 0.0)  # (2,K,W,W)
    tx = jnp.concatenate([txc[0], txc[1]], axis=1)                   # (K, 2W, W)

    vmem_b = int(min(48 << 20,
                     max(16 << 20,
                         2 * (H * 2 * W + H * W) * 4
                         + 2 * (K * H * H + K * 2 * W * W) * 4 + (4 << 20))))

    # ---- pass 2: banded-matmul conv + bias + sigmoid -------------------------
    return pl.pallas_call(
        conv_sigmoid_kernel,
        out_shape=jax.ShapeDtypeStruct((N, 1, H, W), jnp.float32),
        grid=(N,),
        in_specs=[
            pl.BlockSpec((1, H, 2 * W), lambda n: (n, 0, 0)),
            pl.BlockSpec((K, H, H), lambda n: (0, 0, 0)),
            pl.BlockSpec((K, 2 * W, W), lambda n: (0, 0, 0)),
            pl.BlockSpec(memory_space=pltpu.MemorySpace.SMEM),
        ],
        out_specs=pl.BlockSpec((1, 1, H, W), lambda n: (n, 0, 0, 0)),
        compiler_params=pltpu.CompilerParams(
            dimension_semantics=("parallel",),
            vmem_limit_bytes=vmem_b),
    )(cat_maps, ty, tx, b)


def spatial_attention_ref(x, weight, bias):
    """Pure-JAX reference matching the PyTorch module."""
    avg = jnp.mean(x, axis=1, keepdims=True)
    mx = jnp.max(x, axis=1, keepdims=True)
    cat = jnp.concatenate([avg, mx], axis=1)                 # (N, 2, H, W)
    conv = lax.conv_general_dilated(
        cat, weight, window_strides=(1, 1),
        padding=((PAD, PAD), (PAD, PAD)),
        dimension_numbers=("NCHW", "OIHW", "NCHW"),
        precision=lax.Precision.HIGHEST,
    ) + bias.reshape(1, 1, 1, 1)
    return jax.nn.sigmoid(conv)


if __name__ == "__main__":
    key = jax.random.PRNGKey(0)
    kx, kw, kb = jax.random.split(key, 3)

    N, C, H, W = 2, 4, 16, 16
    x = jax.random.normal(kx, (N, C, H, W), dtype=jnp.float32)
    weight = 0.1 * jax.random.normal(kw, (1, 2, K, K), dtype=jnp.float32)
    bias = 0.1 * jax.random.normal(kb, (1,), dtype=jnp.float32)

    out = jax.block_until_ready(spatial_attention(x, weight, bias))
    ref = spatial_attention_ref(x, weight, bias)

    assert out.shape == (N, 1, H, W), out.shape
    err = float(jnp.max(jnp.abs(out - ref)))
    assert jnp.allclose(out, ref, atol=1e-4, rtol=1e-4), err

    print("KERNEL_OK")
</pallas_src>

<mosaic_0001>
module attributes {stable_mosaic.version = 11 : i64} {
  func.func @channel_reduce_kernel(%arg0: i32, %arg1: i32, %arg2: memref<1x4x256xf32, #tpu.memory_space<vmem>>, %arg3: memref<1x2x256xf32, #tpu.memory_space<vmem>>) attributes {dimension_semantics = [#tpu.dimension_semantics<parallel>, #tpu.dimension_semantics<arbitrary>], iteration_bounds = array<i64: 2, 1>, scalar_prefetch = 0 : i64, scratch_operands = 0 : i64, tpu.core_type = #tpu.core_type<tc>, window_params = [{transform_indices = @transform_0, window_bounds = array<i64: 1, 4, 256>}, {transform_indices = @transform_1, window_bounds = array<i64: 1, 2, 256>}]} {
    %c0 = arith.constant 0 : index
    %c0_0 = arith.constant 0 : index
    %c0_1 = arith.constant 0 : index
    %0 = vector.load %arg2[%c0, %c0_0, %c0_1] : memref<1x4x256xf32, #tpu.memory_space<vmem>>, vector<1x1x256xf32>
    %1 = vector.shape_cast %0 : vector<1x1x256xf32> to vector<1x256xf32>
    %c0_2 = arith.constant 0 : index
    %c1 = arith.constant 1 : index
    %c0_3 = arith.constant 0 : index
    %2 = vector.load %arg2[%c0_2, %c1, %c0_3] : memref<1x4x256xf32, #tpu.memory_space<vmem>>, vector<1x1x256xf32>
    %3 = vector.shape_cast %2 : vector<1x1x256xf32> to vector<1x256xf32>
    %4 = arith.addf %1, %3 : vector<1x256xf32>
    %5 = arith.maximumf %1, %3 : vector<1x256xf32>
    %c0_4 = arith.constant 0 : index
    %c2 = arith.constant 2 : index
    %c0_5 = arith.constant 0 : index
    %6 = vector.load %arg2[%c0_4, %c2, %c0_5] : memref<1x4x256xf32, #tpu.memory_space<vmem>>, vector<1x1x256xf32>
    %7 = vector.shape_cast %6 : vector<1x1x256xf32> to vector<1x256xf32>
    %8 = arith.addf %4, %7 : vector<1x256xf32>
    %9 = arith.maximumf %5, %7 : vector<1x256xf32>
    %c0_6 = arith.constant 0 : index
    %c3 = arith.constant 3 : index
    %c0_7 = arith.constant 0 : index
    %10 = vector.load %arg2[%c0_6, %c3, %c0_7] : memref<1x4x256xf32, #tpu.memory_space<vmem>>, vector<1x1x256xf32>
    %11 = vector.shape_cast %10 : vector<1x1x256xf32> to vector<1x256xf32>
    %12 = arith.addf %8, %11 : vector<1x256xf32>
    %13 = arith.maximumf %9, %11 : vector<1x256xf32>
    %c0_i32 = arith.constant 0 : i32
    %14 = arith.cmpi eq, %arg1, %c0_i32 : i32
    %15 = arith.extui %14 : i1 to i32
    %c0_i32_8 = arith.constant 0 : i32
    %16 = arith.cmpi ne, %15, %c0_i32_8 : i32
    scf.if %16 {
      %c0_11 = arith.constant 0 : index
      %c0_12 = arith.constant 0 : index
      %c0_13 = arith.constant 0 : index
      %20 = vector.load %arg3[%c0_11, %c0_12, %c0_13] : memref<1x2x256xf32, #tpu.memory_space<vmem>>, vector<1x1x256xf32>
      %21 = vector.shape_cast %20 : vector<1x1x256xf32> to vector<1x256xf32>
      %22 = vector.shape_cast %12 : vector<1x256xf32> to vector<1x1x256xf32>
      tpu.vector_store %arg3[%c0_11, %c0_12, %c0_13], %22 {strides = array<i32>} : memref<1x2x256xf32, #tpu.memory_space<vmem>>, vector<1x1x256xf32>,
      %c0_14 = arith.constant 0 : index
      %c1_15 = arith.constant 1 : index
      %c0_16 = arith.constant 0 : index
      %23 = vector.load %arg3[%c0_14, %c1_15, %c0_16] : memref<1x2x256xf32, #tpu.memory_space<vmem>>, vector<1x1x256xf32>
      %24 = vector.shape_cast %23 : vector<1x1x256xf32> to vector<1x256xf32>
      %25 = vector.shape_cast %13 : vector<1x256xf32> to vector<1x1x256xf32>
      tpu.vector_store %arg3[%c0_14, %c1_15, %c0_16], %25 {strides = array<i32>} : memref<1x2x256xf32, #tpu.memory_space<vmem>>, vector<1x1x256xf32>,
    } else {
    }
    %c0_i32_9 = arith.constant 0 : i32
    %17 = arith.cmpi sgt, %arg1, %c0_i32_9 : i32
    %18 = arith.extui %17 : i1 to i32
    %c0_i32_10 = arith.constant 0 : i32
    %19 = arith.cmpi ne, %18, %c0_i32_10 : i32
    scf.if %19 {
      %c0_11 = arith.constant 0 : index
      %c0_12 = arith.constant 0 : index
      %c0_13 = arith.constant 0 : index
      %20 = vector.load %arg3[%c0_11, %c0_12, %c0_13] : memref<1x2x256xf32, #tpu.memory_space<vmem>>, vector<1x1x256xf32>
      %21 = vector.shape_cast %20 : vector<1x1x256xf32> to vector<1x256xf32>
      %22 = arith.addf %21, %12 : vector<1x256xf32>
      %c0_14 = arith.constant 0 : index
      %c0_15 = arith.constant 0 : index
      %c0_16 = arith.constant 0 : index
      %23 = vector.load %arg3[%c0_14, %c0_15, %c0_16] : memref<1x2x256xf32, #tpu.memory_space<vmem>>, vector<1x1x256xf32>
      %24 = vector.shape_cast %23 : vector<1x1x256xf32> to vector<1x256xf32>
      %25 = vector.shape_cast %22 : vector<1x256xf32> to vector<1x1x256xf32>
      tpu.vector_store %arg3[%c0_14, %c0_15, %c0_16], %25 {strides = array<i32>} : memref<1x2x256xf32, #tpu.memory_space<vmem>>, vector<1x1x256xf32>,
      %c0_17 = arith.constant 0 : index
      %c1_18 = arith.constant 1 : index
      %c0_19 = arith.constant 0 : index
      %26 = vector.load %arg3[%c0_17, %c1_18, %c0_19] : memref<1x2x256xf32, #tpu.memory_space<vmem>>, vector<1x1x256xf32>
      %27 = vector.shape_cast %26 : vector<1x1x256xf32> to vector<1x256xf32>
      %28 = arith.maximumf %27, %13 : vector<1x256xf32>
      %c0_20 = arith.constant 0 : index
      %c1_21 = arith.constant 1 : index
      %c0_22 = arith.constant 0 : index
      %29 = vector.load %arg3[%c0_20, %c1_21, %c0_22] : memref<1x2x256xf32, #tpu.memory_space<vmem>>, vector<1x1x256xf32>
      %30 = vector.shape_cast %29 : vector<1x1x256xf32> to vector<1x256xf32>
      %31 = vector.shape_cast %28 : vector<1x256xf32> to vector<1x1x256xf32>
      tpu.vector_store %arg3[%c0_20, %c1_21, %c0_22], %31 {strides = array<i32>} : memref<1x2x256xf32, #tpu.memory_space<vmem>>, vector<1x1x256xf32>,
    } else {
    }
    return
  }
  func.func @transform_0(%arg0: i32, %arg1: i32) -> (i32, i32, i32) {
    %c0_i32 = arith.constant 0 : i32
    %c0_i32_0 = arith.constant 0 : i32
    return %arg0, %arg1, %c0_i32 : i32, i32, i32
  }
  func.func @transform_1(%arg0: i32, %arg1: i32) -> (i32, i32, i32) {
    %c0_i32 = arith.constant 0 : i32
    %c0_i32_0 = arith.constant 0 : i32
    %c0_i32_1 = arith.constant 0 : i32
    return %arg0, %c0_i32, %c0_i32_0 : i32, i32, i32
  }
}

</mosaic_0001>

<llo_original>
// kernel: tpu_custom_call.1
$region0: #{tpu_custom_call.1}
  #allocation0 [shape = 'u32[]', space=smem, size = 0x4, offset = 0x4, fixed_abs, tag = 'smem constant byte address 0x4 - core index']
  #allocation1 [shape = 'u32[72,128]{1,0:T(1,128)}', space=vmem, size = 0x9000, scoped, tag = 'internal scratch']
  %s0 = inlined_call_operand.hbm [shape: f32[2,4,256], index: 0, kind: input, shape index: {}]
  %s1 = inlined_call_operand.hbm [shape: f32[2,2,256], index: 1, kind: output, shape index: {}]
  %s2 = sld [smem:[#allocation0]]
  $region49: #{tpu_custom_call.1} parent=0
    _
  %s4 = ssub.s32 1, %s2
  %s5 = scalar_select 0, %s4, %s2
  $region1: #{tpu_custom_call.1} parent=0
    #allocation2 [shape = 'u8[8192]{0}', space=vmem, size = 0x2000, scoped, tag = 'input window, operand 0']
    #allocation3 [shape = 's32[2]{0}', space=sflag, size = 0x8, scoped, tag = 'scoped memory for tpu_custom_call.1']
    #allocation4 [shape = 's32[2]{0}', space=sflag, size = 0x8, scoped, tag = 'scoped memory for tpu_custom_call.1']
    #allocation5 [shape = 'u8[4096]{0}', space=vmem, size = 0x1000, scoped, tag = 'output window, operand 0']
    %6 = vsyncpa [#allocation3], 0
    %s7 = scalar_lea.sflag [#allocation3], 1
    %8 = vsyncpa %s7, 0
    %9 = vsyncpa [#allocation4], 0
    %s10 = scalar_lea.sflag [#allocation4], 1
    %11 = vsyncpa %s10, 0
    loop: start=0, step=1, limit=4
    $region2: #{tpu_custom_call.1} parent=1 // loop_pre_header
      _
    $region3: #{tpu_custom_call.1} parent=1 // loop_header
      %s13 = sphi 0, %s17
      %p14 = scmp.ge.s32.totalorder %s13, 4
      %s20 = sphi 0, %s32
      %s21 = sphi 0, %s28
      %s22 = sphi 0, %s20
      %s23 = sphi 0, %s21
      %s24 = sphi 0, %s22
      %s25 = sphi 0, %s23
      %s37 = sphi 0, %s39
      %s40 = sphi 0, %s37
      %s41 = sphi 0, %s40
      %s57 = sphi 0, %s41
      %s63 = sphi 0, %s65
      %s66 = sphi 0, %s63
      %s67 = sphi 0, %s66
      %s83 = sphi 0, %s67
    $region4: #{tpu_custom_call.1} parent=1 // loop_header_branch
      %16 = sbr.rel (%p14) target = $region8
    $region5: #{tpu_custom_call.1} parent=1 // loop_body
      %s18 = ssub.s32 %s13, 1
      %s19 = ssub.s32 %s13, 2
      %s26 = sadd.s32 1, %s21
      %p27 = scmp.ge.s32.totalorder %s26, 1
      %s28 = scalar_select %p27, 0, %s26
      %s29 = sadd.s32 1, %s20
      %s30 = scalar_select %p27, %s29, %s20
      %p31 = scmp.ge.s32.totalorder %s30, 2
      %s32 = scalar_select %p31, 0, %s30
      %s33 = ssub.s32 %s20, %s32
      %s34 = ssub.s32 %s21, %s28
      %s35 = sor.u32 %s33, %s34
      %p36 = scmp.eq.s32.totalorder %s35, 0
      %s38 = sadd.s32 %s37, 1
      %s39 = scalar_select %p36, %s37, %s38
      %p42 = pneg %p36
      %p43 = scmp.eq.s32.totalorder %s13, 1
      %p44 = por %p42, %p43
      %p45 = scmp.ne.s32.totalorder %s37, %s40
      %p46 = scmp.eq.s32.totalorder %s13, 0
      %p47 = por %p45, %p46
      %p48 = scmp.ne.s32.totalorder %s37, %s40
      %p49 = scmp.eq.s32.totalorder %s18, 1
      %p50 = por %p48, %p49
      %p51 = scmp.ne.s32.totalorder %s40, %s41
      %p52 = scmp.eq.s32.totalorder %s18, 0
      %p53 = por %p51, %p52
      %p54 = scmp.ne.s32.totalorder %s40, %s41
      %p55 = scmp.eq.s32.totalorder %s19, 1
      %p56 = por %p54, %p55
      %p58 = scmp.ne.s32.totalorder %s41, %s57
      %p59 = scmp.eq.s32.totalorder %s19, 0
      %p60 = por %p58, %p59
      %s61 = ssub.s32 %s20, %s32
      %p62 = scmp.eq.s32.totalorder %s61, 0
      %s64 = sadd.s32 %s63, 1
      %s65 = scalar_select %p62, %s63, %s64
      %p68 = pneg %p62
      %p69 = scmp.eq.s32.totalorder %s13, 1
      %p70 = por %p68, %p69
      %p71 = scmp.ne.s32.totalorder %s63, %s66
      %p72 = scmp.eq.s32.totalorder %s13, 0
      %p73 = por %p71, %p72
      %p74 = scmp.ne.s32.totalorder %s63, %s66
      %p75 = scmp.eq.s32.totalorder %s18, 1
      %p76 = por %p74, %p75
      %p77 = scmp.ne.s32.totalorder %s66, %s67
      %p78 = scmp.eq.s32.totalorder %s18, 0
      %p79 = por %p77, %p78
      %p80 = scmp.ne.s32.totalorder %s66, %s67
      %p81 = scmp.eq.s32.totalorder %s19, 1
      %p82 = por %p80, %p81
      %p84 = scmp.ne.s32.totalorder %s67, %s83
      %p85 = scmp.eq.s32.totalorder %s19, 0
      %p86 = por %p84, %p85
      %p87 = scmp.le.s32.totalorder 1, %s13
      %p88 = scmp.lt.s32.totalorder %s13, 3
      %p89 = pnand %p87, %p88
      %p90 = pneg %p89
      // Predicated region
      $region9: #{tpu_custom_call.1} parent=5 // pred_check
        _
      $region10: #{tpu_custom_call.1} parent=5 // pred_check_branch
        %92 = sbr.rel (%p89) target = $region12
      $region11: #{tpu_custom_call.1} parent=5 // pred_region
        %s93 = ssub.s32 %s13, 1
      $region12: #{tpu_custom_call.1} parent=5 // pred_fallthru
        _
      %p94 = scmp.lt.s32.totalorder %s13, 2
      // Predicated region
      $region13: #{tpu_custom_call.1} parent=5 // pred_check
        %p95 = pneg %p94
      $region14: #{tpu_custom_call.1} parent=5 // pred_check_branch
        %97 = sbr.rel (%p95) target = $region16
      $region15: #{tpu_custom_call.1} parent=5 // pred_region
        // Predicated region
        $region17: #{tpu_custom_call.1} parent=15 // pred_check
          %p98 = pneg %p47
        $region18: #{tpu_custom_call.1} parent=15 // pred_check_branch
          %100 = sbr.rel (%p98) target = $region20
        $region19: #{tpu_custom_call.1} parent=15 // pred_region
          %s101 = sand.u32 %s37, 1
          %s102 = scalar_lea.sflag [#allocation3], %s101
          %s103 = sand.u32 %s37, 1
          %s104 = smul.addr %s103, 8
          %s105 = scalar_lea.vmem [#allocation2], %s104
          %107 = vsyncadd %s102, 0
          %s108 = smul.addr %s21, 2
          %s109 = smul.addr %s20, 2
          %s110 = sadd.s32 %s108, %s109
          %s111 = smul.addr %s110, 4
          %s112 = scalar_lea.hbm %s0, %s111
          %s114 = sshll.u32 %s112, 4
          %s115 = int_to_ptr.hbm [resolvable:$true] %s114
          %s116 = sshll.u32 %s105, 4
          %s117 = int_to_ptr.vmem [resolvable:$true] %s116
          %119 = dma.hbm_to_vmem [thread:$0]  %s115, 128, %s117, %s102
        $region20: #{tpu_custom_call.1} parent=15 // pred_fallthru
          _
      $region16: #{tpu_custom_call.1} parent=5 // pred_fallthru
        _
      %p120 = scmp.le.s32.totalorder 1, %s13
      %p121 = scmp.lt.s32.totalorder %s13, 3
      %p122 = pnand %p120, %p121
      %p123 = pneg %p122
      // Predicated region
      $region21: #{tpu_custom_call.1} parent=5 // pred_check
        _
      $region22: #{tpu_custom_call.1} parent=5 // pred_check_branch
        %125 = sbr.rel (%p122) target = $region24
      $region23: #{tpu_custom_call.1} parent=5 // pred_region
        %s126 = ssub.s32 %s13, 1
        %s127 = sand.u32 %s40, 1
        %s128 = scalar_lea.sflag [#allocation3], %s127
        %s129 = sand.u32 %s40, 1
        %s130 = smul.addr %s129, 8
        %s131 = scalar_lea.vmem [#allocation2], %s130
        // Predicated region
        $region25: #{tpu_custom_call.1} parent=23 // pred_check
          %p132 = pneg %p53
        $region26: #{tpu_custom_call.1} parent=23 // pred_check_branch
          %134 = sbr.rel (%p132) target = $region28
        $region27: #{tpu_custom_call.1} parent=23 // pred_region
          %136 = dma.done %s128, 128
        $region28: #{tpu_custom_call.1} parent=23 // pred_fallthru
          _
        %s137 = sand.u32 %s40, 1
        %s138 = scalar_lea.sflag [#allocation3], %s137
        %s139 = sand.u32 %s40, 1
        %s140 = smul.addr %s139, 8
        %s141 = scalar_lea.vmem [#allocation2], %s140
        %p142 = pneg %p53
        %p143 = pneg %p50
        %p144 = pneg %p79
        %p145 = pneg %p76
        %s146 = sand.u32 %s66, 1
        %s147 = scalar_lea.sflag [#allocation4], %s146
        %s148 = sand.u32 %s66, 1
        %s149 = smul.addr %s148, 4
        %s150 = scalar_lea.vmem [#allocation5], %s149
        %v151 = vld [vmem:[%s131] ss:$4 sm:$0x3]
        %s152 = scalar_lea.vmem %s131, 1 [#allocation2]
        %v153 = vld [vmem:[%s152] ss:$4 sm:$0x3]
        %v154 = vadd.f32 %v151, %v153
        %v155 = vmax.f32 %v151, %v153
        %s156 = scalar_lea.vmem %s131, 2 [#allocation2]
        %v157 = vld [vmem:[%s156] ss:$4 sm:$0x3]
        %v158 = vadd.f32 %v154, %v157
        %v159 = vmax.f32 %v155, %v157
        %s160 = scalar_lea.vmem %s131, 3 [#allocation2]
        %v161 = vld [vmem:[%s160] ss:$4 sm:$0x3]
        %v162 = vadd.f32 %v158, %v161
        %v163 = vmax.f32 %v159, %v161
        %p164 = scmp.eq.s32.totalorder %s23, 0
        // Predicated region
        $region29: #{tpu_custom_call.1} parent=23 // pred_check
          %p165 = pneg %p164
        $region30: #{tpu_custom_call.1} parent=23 // pred_check_branch
          %167 = sbr.rel (%p165) target = $region32
        $region31: #{tpu_custom_call.1} parent=23 // pred_region
          %v168 = vlaneseq
          %vm169 = vcmp.ge.s32.totalorder %v168, 0
          %vm170 = vcmp.lt.s32.totalorder %v168, 256
          %vm171 = vmand %vm169, %vm170
          %172 = vst.msk [vmem:[%s150] ss:$2 sm:$0x3] %vm171, %v162
          %s173 = scalar_lea.vmem %s150, 1 [#allocation5]
          %174 = vst.msk [vmem:[%s173] ss:$2 sm:$0x3] %vm171, %v163
        $region32: #{tpu_custom_call.1} parent=23 // pred_fallthru
          _
        %p175 = scmp.gt.s32.totalorder %s23, 0
        // Predicated region
        $region33: #{tpu_custom_call.1} parent=23 // pred_check
          %p176 = pneg %p175
        $region34: #{tpu_custom_call.1} parent=23 // pred_check_branch
          %178 = sbr.rel (%p176) target = $region36
        $region35: #{tpu_custom_call.1} parent=23 // pred_region
          %v179 = vld [vmem:[%s150] ss:$2 sm:$0x3]
          %v180 = vadd.f32 %v179, %v162
          %v181 = vlaneseq
          %vm182 = vcmp.ge.s32.totalorder %v181, 0
          %vm183 = vcmp.lt.s32.totalorder %v181, 256
          %vm184 = vmand %vm182, %vm183
          %185 = vst.msk [vmem:[%s150] ss:$2 sm:$0x3] %vm184, %v180
          %s186 = scalar_lea.vmem %s150, 1 [#allocation5]
          %v187 = vld [vmem:[%s186] ss:$2 sm:$0x3]
          %v188 = vmax.f32 %v187, %v163
          %189 = vst.msk [vmem:[%s186] ss:$2 sm:$0x3] %vm184, %v188
        $region36: #{tpu_custom_call.1} parent=23 // pred_fallthru
          _
        %s190 = sand.u32 %s66, 1
        %s191 = scalar_lea.sflag [#allocation4], %s190
        %s192 = sand.u32 %s66, 1
        %s193 = smul.addr %s192, 4
        %s194 = scalar_lea.vmem [#allocation5], %s193
        // Predicated region
        $region37: #{tpu_custom_call.1} parent=23 // pred_check
          %p195 = pneg %p76
        $region38: #{tpu_custom_call.1} parent=23 // pred_check_branch
          %197 = sbr.rel (%p195) target = $region40
        $region39: #{tpu_custom_call.1} parent=23 // pred_region
          %199 = vsyncadd %s191, 0
          %s200 = smul.addr %s22, 2
          %s201 = smul.addr %s200, 2
          %s202 = scalar_lea.hbm %s1, %s201
          %s204 = sshll.u32 %s194, 4
          %s205 = int_to_ptr.vmem [resolvable:$true] %s204
          %s206 = sshll.u32 %s202, 4
          %s207 = int_to_ptr.hbm [resolvable:$true] %s206
          %209 = dma.vmem_to_hbm [thread:$0]  %s205, 64, %s207, %s191
        $region40: #{tpu_custom_call.1} parent=23 // pred_fallthru
          _
      $region24: #{tpu_custom_call.1} parent=5 // pred_fallthru
        _
      %p210 = scmp.le.s32.totalorder 2, %s13
      // Predicated region
      $region41: #{tpu_custom_call.1} parent=5 // pred_check
        %p211 = pneg %p210
      $region42: #{tpu_custom_call.1} parent=5 // pred_check_branch
        %213 = sbr.rel (%p211) target = $region44
      $region43: #{tpu_custom_call.1} parent=5 // pred_region
        %s214 = ssub.s32 %s13, 2
        // Predicated region
        $region45: #{tpu_custom_call.1} parent=43 // pred_check
          %p215 = pneg %p82
        $region46: #{tpu_custom_call.1} parent=43 // pred_check_branch
          %217 = sbr.rel (%p215) target = $region48
        $region47: #{tpu_custom_call.1} parent=43 // pred_region
          %s218 = sand.u32 %s67, 1
          %s219 = scalar_lea.sflag [#allocation4], %s218
          %s220 = sand.u32 %s67, 1
          %s221 = smul.addr %s220, 4
          %s222 = scalar_lea.vmem [#allocation5], %s221
          %224 = dma.done %s219, 64
        $region48: #{tpu_custom_call.1} parent=43 // pred_fallthru
          _
      $region44: #{tpu_custom_call.1} parent=5 // pred_fallthru
        _
    $region6: #{tpu_custom_call.1} parent=1 // loop_footer
      %s17 = sadd.s32 1, %s13
    $region7: #{tpu_custom_call.1} parent=1 // loop_footer_branch
      %12 = sbr.rel target = $region3
    $region8: #{tpu_custom_call.1} parent=1 // loop_exit
      _
    %225 = vsyncpa [#allocation3], 1
    %s226 = scalar_lea.sflag [#allocation3], 1
    %227 = vsyncpa %s226, 1
    %228 = vsyncpa [#allocation4], 1
    %s229 = scalar_lea.sflag [#allocation4], 1
    %230 = vsyncpa %s229, 1

</llo_original>
